<compile_context>
chip_gen: v5e
topology: v5e:2x2
jax: 0.10.0
libtpu: 0.0.40
codegen_flags: <defaults>
</compile_context>

<pallas_src>
import functools

import jax
import jax.numpy as jnp
from jax import lax
from jax.experimental import pallas as pl
from jax.experimental.pallas import tpu as pltpu


def _round_up(x, m):
    return (x + m - 1) // m * m


def _tile_and_pad(dim, align, target):
    """Pick (tile, padded_dim): tile divides padded_dim, tile % align == 0 (or tile == full dim)."""
    padded = _round_up(dim, align)
    if padded <= target:
        return padded, padded
    for t in range(target, align - 1, -align):
        if padded % t == 0:
            return t, padded
    return target, _round_up(dim, target)  # unreachable (align always divides padded)


_VMEM_LIMIT = 32 * 1024 * 1024


# ---------------------------------------------------------------------------
# Pallas kernels
# ---------------------------------------------------------------------------

def _matmul_kernel(a_ref, b_ref, o_ref):
    # Output block index is constant across the K grid axis -> o_ref stays VMEM resident;
    # accumulate directly into it (no scratch).
    @pl.when(pl.program_id(2) == 0)
    def _():
        o_ref[...] = jnp.zeros_like(o_ref)

    o_ref[...] += jnp.dot(a_ref[...], b_ref[...], preferred_element_type=jnp.float32)


def _matmul_bias_kernel(a_ref, b_ref, bias_ref, o_ref):
    @pl.when(pl.program_id(2) == 0)
    def _():
        o_ref[...] = jnp.zeros_like(o_ref) + bias_ref[...]

    o_ref[...] += jnp.dot(a_ref[...], b_ref[...], preferred_element_type=jnp.float32)


def _bn_stats_kernel(x_ref, sum_ref, sq_ref):
    # Per-channel sum and sum-of-squares, accumulated over row tiles.
    @pl.when(pl.program_id(0) == 0)
    def _():
        sum_ref[...] = jnp.zeros_like(sum_ref)
        sq_ref[...] = jnp.zeros_like(sq_ref)

    x = x_ref[...]
    sum_ref[...] += jnp.sum(x, axis=0, keepdims=True)
    sq_ref[...] += jnp.sum(x * x, axis=0, keepdims=True)


def _bn_apply_kernel(x_ref, scale_ref, shift_ref, *rest, relu, has_res):
    if has_res:
        res_ref, o_ref = rest
    else:
        (o_ref,) = rest
    y = x_ref[...] * scale_ref[...] + shift_ref[...]
    if has_res:
        y = y + res_ref[...]
    if relu:
        y = jnp.maximum(y, 0.0)
    o_ref[...] = y


# ---------------------------------------------------------------------------
# Pallas wrappers
# ---------------------------------------------------------------------------

def matmul(a, b, bias=None, *, tm_target=512, tn_target=512, tk_target=512):
    """(M,K) @ (K,N) [+ bias], bf16 MXU inputs, f32 accumulation, tiled M/N/K grid."""
    M, K = a.shape
    K2, N = b.shape
    assert K == K2
    tm, Mp = _tile_and_pad(M, 16, tm_target)   # 16-row alignment for bf16 sublane packing
    tk, Kp = _tile_and_pad(K, 128, tk_target)
    tn, Np = _tile_and_pad(N, 128, tn_target)

    a_p = jnp.pad(a.astype(jnp.bfloat16), ((0, Mp - M), (0, Kp - K)))
    b_p = jnp.pad(b.astype(jnp.bfloat16), ((0, Kp - K), (0, Np - N)))

    in_specs = [
        pl.BlockSpec((tm, tk), lambda i, j, k: (i, k)),
        pl.BlockSpec((tk, tn), lambda i, j, k: (k, j)),
    ]
    inputs = [a_p, b_p]
    if bias is not None:
        bias_p = jnp.pad(bias.astype(jnp.float32).reshape(1, N), ((0, 0), (0, Np - N)))
        in_specs.append(pl.BlockSpec((1, tn), lambda i, j, k: (0, j)))
        inputs.append(bias_p)
        kernel = _matmul_bias_kernel
    else:
        kernel = _matmul_kernel

    out = pl.pallas_call(
        kernel,
        out_shape=jax.ShapeDtypeStruct((Mp, Np), jnp.float32),
        grid=(Mp // tm, Np // tn, Kp // tk),
        in_specs=in_specs,
        out_specs=pl.BlockSpec((tm, tn), lambda i, j, k: (i, j)),
        compiler_params=pltpu.CompilerParams(
            dimension_semantics=("parallel", "parallel", "arbitrary"),
            vmem_limit_bytes=_VMEM_LIMIT),
    )(*inputs)
    return out[:M, :N]


def _bn_stats(x2d, *, tm_target=256):
    """Per-channel (sum, sum_sq) over rows via a tiled Pallas reduction."""
    M, C = x2d.shape
    Cp = _round_up(C, 128)
    tm, Mp = _tile_and_pad(M, 8, tm_target)
    x_p = jnp.pad(x2d, ((0, Mp - M), (0, Cp - C)))   # zero rows/cols contribute nothing
    sums, sqs = pl.pallas_call(
        _bn_stats_kernel,
        out_shape=(jax.ShapeDtypeStruct((1, Cp), jnp.float32),
                   jax.ShapeDtypeStruct((1, Cp), jnp.float32)),
        grid=(Mp // tm,),
        in_specs=[pl.BlockSpec((tm, Cp), lambda i: (i, 0))],
        out_specs=(pl.BlockSpec((1, Cp), lambda i: (0, 0)),
                   pl.BlockSpec((1, Cp), lambda i: (0, 0))),
        compiler_params=pltpu.CompilerParams(
            dimension_semantics=("arbitrary",),
            vmem_limit_bytes=_VMEM_LIMIT),
    )(x_p)
    return sums[0, :C], sqs[0, :C]


def bn_act(x2d, gamma, beta, residual=None, relu=True, eps=1e-5, *, tm_target=256):
    """Training-mode BatchNorm over rows (per channel), optional fused residual + ReLU."""
    M, C = x2d.shape
    s, ss = _bn_stats(x2d)
    n = jnp.float32(M)
    mean = s / n
    var = jnp.maximum(ss / n - mean * mean, 0.0)      # biased variance (PyTorch training BN)
    scale = gamma.astype(jnp.float32) * lax.rsqrt(var + eps)
    shift = beta.astype(jnp.float32) - mean * scale

    Cp = _round_up(C, 128)
    tm, Mp = _tile_and_pad(M, 8, tm_target)
    x_p = jnp.pad(x2d, ((0, Mp - M), (0, Cp - C)))
    scale_p = jnp.pad(scale.reshape(1, C), ((0, 0), (0, Cp - C)))
    shift_p = jnp.pad(shift.reshape(1, C), ((0, 0), (0, Cp - C)))

    inputs = [x_p, scale_p, shift_p]
    in_specs = [
        pl.BlockSpec((tm, Cp), lambda i: (i, 0)),
        pl.BlockSpec((1, Cp), lambda i: (0, 0)),
        pl.BlockSpec((1, Cp), lambda i: (0, 0)),
    ]
    has_res = residual is not None
    if has_res:
        inputs.append(jnp.pad(residual.astype(jnp.float32), ((0, Mp - M), (0, Cp - C))))
        in_specs.append(pl.BlockSpec((tm, Cp), lambda i: (i, 0)))

    kernel = functools.partial(_bn_apply_kernel, relu=relu, has_res=has_res)
    out = pl.pallas_call(
        kernel,
        out_shape=jax.ShapeDtypeStruct((Mp, Cp), jnp.float32),
        grid=(Mp // tm,),
        in_specs=in_specs,
        out_specs=pl.BlockSpec((tm, Cp), lambda i: (i, 0)),
        compiler_params=pltpu.CompilerParams(
            dimension_semantics=("parallel",),
            vmem_limit_bytes=_VMEM_LIMIT),
    )(*inputs)
    return out[:M, :C]


# ---------------------------------------------------------------------------
# Convolution / pooling glue
# ---------------------------------------------------------------------------

def _im2col(x, kh, kw, stride, pad):
    """Patch extraction in bf16 (halves HBM bytes of the patch matrix)."""
    x = x.astype(jnp.bfloat16)
    N, H, W, C = x.shape
    xp = jnp.pad(x, ((0, 0), (pad, pad), (pad, pad), (0, 0)))
    Ho = (H + 2 * pad - kh) // stride + 1
    Wo = (W + 2 * pad - kw) // stride + 1
    cols = []
    for i in range(kh):
        for j in range(kw):
            cols.append(xp[:, i:i + stride * Ho:stride, j:j + stride * Wo:stride, :])
    patches = jnp.concatenate(cols, axis=-1)          # (N, Ho, Wo, kh*kw*C)
    return patches.reshape(N * Ho * Wo, kh * kw * C), (N, Ho, Wo)


def conv2d(x, w, stride, pad, bias=None):
    """x: NHWC, w: torch layout (Cout, Cin, kh, kw).  Bias only used for the fc path."""
    N, H, W, C = x.shape
    Cout, Cin, kh, kw = w.shape
    if kh == 1 and kw == 1:
        assert pad == 0
        xs = x if stride == 1 else x[:, ::stride, ::stride, :]
        _, Ho, Wo, _ = xs.shape
        cols = xs.reshape(N * Ho * Wo, C)
    else:
        cols, (N, Ho, Wo) = _im2col(x, kh, kw, stride, pad)
    w_mat = jnp.transpose(w, (2, 3, 1, 0)).reshape(kh * kw * Cin, Cout)
    out = matmul(cols, w_mat, bias=bias)
    return out.reshape(N, Ho, Wo, Cout)


def maxpool_3x3_s2_p1(x):
    """nn.MaxPool2d(3, stride=2, padding=1) as a fold of jnp.maximum over 9 shifted views.
    Purely memory-bound; left to XLA fusion on purpose (no patch stack, no giant VMEM block)."""
    N, H, W, C = x.shape
    k, s, pad = 3, 2, 1
    Ho = (H + 2 * pad - k) // s + 1
    Wo = (W + 2 * pad - k) // s + 1
    xp = jnp.pad(x, ((0, 0), (pad, pad), (pad, pad), (0, 0)), constant_values=-jnp.inf)
    out = None
    for i in range(k):
        for j in range(k):
            v = xp[:, i:i + s * Ho:s, j:j + s * Wo:s, :]
            out = v if out is None else jnp.maximum(out, v)
    return out


# ---------------------------------------------------------------------------
# ResNet forward
# ---------------------------------------------------------------------------

def _bn_nhwc(y, gamma, beta, residual=None, relu=True):
    N, H, W, C = y.shape
    res2d = None if residual is None else residual.reshape(-1, C)
    out = bn_act(y.reshape(-1, C), gamma, beta, residual=res2d, relu=relu)
    return out.reshape(N, H, W, C)


def bottleneck_forward(x, p):
    stride, has_ds = p["stride"], p["has_ds"]
    identity = x
    # Conv biases omitted throughout: a per-channel constant is exactly removed by the
    # training-mode BatchNorm mean subtraction that immediately follows every conv.
    y = conv2d(x, p["conv1_w"], 1, 0)
    y = _bn_nhwc(y, p["bn1_g"], p["bn1_b"], relu=True)
    y = conv2d(y, p["conv2_w"], stride, 1)
    y = _bn_nhwc(y, p["bn2_g"], p["bn2_b"], relu=True)
    y = conv2d(y, p["conv3_w"], 1, 0)
    if has_ds:
        idn = conv2d(identity, p["ds_w"], stride, 0)
        idn = _bn_nhwc(idn, p["ds_bn_g"], p["ds_bn_b"], relu=False)
    else:
        idn = identity
    y = _bn_nhwc(y, p["bn3_g"], p["bn3_b"], residual=idn, relu=True)
    return y


def resnet_forward(x_nchw, params):
    x = jnp.transpose(x_nchw, (0, 2, 3, 1)).astype(jnp.float32)   # NCHW -> NHWC
    y = conv2d(x, params["conv1_w"], stride=2, pad=3)
    y = _bn_nhwc(y, params["bn1_g"], params["bn1_b"], relu=True)
    y = maxpool_3x3_s2_p1(y)
    for layer in params["layers"]:
        for blk in layer["blocks"]:
            y = bottleneck_forward(y, blk)
    # AdaptiveAvgPool2d((1,1)) + flatten: tiny spatial mean, left to XLA.
    y = jnp.mean(y, axis=(1, 2))                                   # (N, 2048)
    logits = matmul(y, params["fc_w"].T, bias=params["fc_b"])
    return logits


# ---------------------------------------------------------------------------
# Deterministic parameter init (mirrors the nn.Module __init__ shapes)
# ---------------------------------------------------------------------------

def _init_conv(key, cout, cin, kh, kw):
    return jax.random.normal(key, (cout, cin, kh, kw), jnp.float32) * 0.05


def _init_bn(key, c):
    k1, k2 = jax.random.split(key)
    g = 1.0 + 0.1 * jax.random.normal(k1, (c,), jnp.float32)
    b = 0.1 * jax.random.normal(k2, (c,), jnp.float32)
    return g, b


def init_params(key, image_channels, num_classes, layers_cfg):
    counter = [0]

    def nk():
        counter[0] += 1
        return jax.random.fold_in(key, counter[0])

    params = {}
    params["conv1_w"] = _init_conv(nk(), 64, image_channels, 7, 7)
    params["bn1_g"], params["bn1_b"] = _init_bn(nk(), 64)

    in_ch = 64
    params["layers"] = []
    for num_blocks, out_ch, stride in zip(layers_cfg, (64, 128, 256, 512), (1, 2, 2, 2)):
        blocks = []
        for bi in range(num_blocks):
            s = stride if bi == 0 else 1
            has_ds = bi == 0 and (stride != 1 or in_ch != out_ch * 4)
            blk = {"stride": s, "has_ds": has_ds}
            blk["conv1_w"] = _init_conv(nk(), out_ch, in_ch, 1, 1)
            blk["bn1_g"], blk["bn1_b"] = _init_bn(nk(), out_ch)
            blk["conv2_w"] = _init_conv(nk(), out_ch, out_ch, 3, 3)
            blk["bn2_g"], blk["bn2_b"] = _init_bn(nk(), out_ch)
            blk["conv3_w"] = _init_conv(nk(), out_ch * 4, out_ch, 1, 1)
            blk["bn3_g"], blk["bn3_b"] = _init_bn(nk(), out_ch * 4)
            if has_ds:
                blk["ds_w"] = _init_conv(nk(), out_ch * 4, in_ch, 1, 1)
                blk["ds_bn_g"], blk["ds_bn_b"] = _init_bn(nk(), out_ch * 4)
            blocks.append(blk)
            in_ch = out_ch * 4
        params["layers"].append({"blocks": blocks})

    params["fc_w"] = jax.random.normal(nk(), (num_classes, 512 * 4), jnp.float32) * 0.02
    params["fc_b"] = jnp.zeros((num_classes,), jnp.float32)
    return params


if __name__ == "__main__":
    key = jax.random.PRNGKey(0)
    image_channels, num_classes = 3, 10
    layers_cfg = (1, 1, 1, 1)  # smallest bottleneck ResNet variant
    params = init_params(key, image_channels, num_classes, layers_cfg)

    x = jax.random.normal(jax.random.fold_in(key, 999),
                          (2, image_channels, 16, 16), jnp.float32)  # NCHW like PyTorch

    logits = resnet_forward(x, params)
    logits = jax.block_until_ready(logits)
    assert logits.shape == (2, num_classes)
    assert bool(jnp.all(jnp.isfinite(logits)))
    print("KERNEL_OK")
</pallas_src>

<mosaic_0001>
module attributes {stable_mosaic.version = 11 : i64} {
  func.func @_matmul_kernel(%arg0: i32, %arg1: i32, %arg2: i32, %arg3: memref<128x256xbf16, #tpu.memory_space<vmem>>, %arg4: memref<256x128xbf16, #tpu.memory_space<vmem>>, %arg5: memref<128x128xf32, #tpu.memory_space<vmem>>) attributes {dimension_semantics = [#tpu.dimension_semantics<parallel>, #tpu.dimension_semantics<parallel>, #tpu.dimension_semantics<arbitrary>], iteration_bounds = array<i64: 1, 1, 1>, scalar_prefetch = 0 : i64, scratch_operands = 0 : i64, tpu.core_type = #tpu.core_type<tc>, window_params = [{transform_indices = @transform_0, window_bounds = array<i64: 128, 256>}, {transform_indices = @transform_1, window_bounds = array<i64: 256, 128>}, {transform_indices = @transform_2, window_bounds = array<i64: 128, 128>}]} {
    %c0_i32 = arith.constant 0 : i32
    %0 = arith.cmpi eq, %arg2, %c0_i32 : i32
    %1 = arith.extui %0 : i1 to i32
    %c0_i32_0 = arith.constant 0 : i32
    %2 = arith.cmpi ne, %1, %c0_i32_0 : i32
    scf.if %2 {
      %cst_8 = arith.constant 0.000000e+00 : f32
      %9 = vector.broadcast %cst_8 : f32 to vector<128x128xf32>
      %c0_9 = arith.constant 0 : index
      %c0_10 = arith.constant 0 : index
      %10 = vector.load %arg5[%c0_9, %c0_10] : memref<128x128xf32, #tpu.memory_space<vmem>>, vector<128x128xf32>
      tpu.vector_store %arg5[%c0_9, %c0_10], %9 {strides = array<i32>} : memref<128x128xf32, #tpu.memory_space<vmem>>, vector<128x128xf32>,
    } else {
    }
    %c0 = arith.constant 0 : index
    %c0_1 = arith.constant 0 : index
    %3 = vector.load %arg5[%c0, %c0_1] : memref<128x128xf32, #tpu.memory_space<vmem>>, vector<128x128xf32>
    %c0_2 = arith.constant 0 : index
    %c0_3 = arith.constant 0 : index
    %4 = vector.load %arg3[%c0_2, %c0_3] : memref<128x256xbf16, #tpu.memory_space<vmem>>, vector<128x256xbf16>
    %c0_4 = arith.constant 0 : index
    %c0_5 = arith.constant 0 : index
    %5 = vector.load %arg4[%c0_4, %c0_5] : memref<256x128xbf16, #tpu.memory_space<vmem>>, vector<256x128xbf16>
    %cst = arith.constant dense<0.000000e+00> : vector<128x128xf32>
    %6 = tpu.matmul %4, %5, %cst {dimension_numbers = #tpu.dot_dimension_numbers<[1], [0], [0], [1], [0, 0, 1, 1], [], []>} : vector<128x256xbf16>, vector<256x128xbf16>, vector<128x128xf32> -> vector<128x128xf32>
    %7 = arith.addf %3, %6 : vector<128x128xf32>
    %c0_6 = arith.constant 0 : index
    %c0_7 = arith.constant 0 : index
    %8 = vector.load %arg5[%c0_6, %c0_7] : memref<128x128xf32, #tpu.memory_space<vmem>>, vector<128x128xf32>
    tpu.vector_store %arg5[%c0_6, %c0_7], %7 {strides = array<i32>} : memref<128x128xf32, #tpu.memory_space<vmem>>, vector<128x128xf32>,
    return
  }
  func.func @transform_0(%arg0: i32, %arg1: i32, %arg2: i32) -> (i32, i32) {
    %c0_i32 = arith.constant 0 : i32
    return %arg0, %arg2 : i32, i32
  }
  func.func @transform_1(%arg0: i32, %arg1: i32, %arg2: i32) -> (i32, i32) {
    %c0_i32 = arith.constant 0 : i32
    return %arg2, %arg1 : i32, i32
  }
  func.func @transform_2(%arg0: i32, %arg1: i32, %arg2: i32) -> (i32, i32) {
    %c0_i32 = arith.constant 0 : i32
    return %arg0, %arg1 : i32, i32
  }
}

</mosaic_0001>

<llo_original>
// kernel: tpu_custom_call.1
$region0: #{tpu_custom_call.1}
  #allocation0 [shape = 'u32[]', space=smem, size = 0x4, offset = 0x4, fixed_abs, tag = 'smem constant byte address 0x4 - core index']
  #allocation1 [shape = 'u32[72,128]{1,0:T(1,128)}', space=vmem, size = 0x9000, scoped, tag = 'internal scratch']
  %s0 = inlined_call_operand.hbm [shape: bf16[128,256], index: 0, kind: input, shape index: {}]
  %s1 = inlined_call_operand.hbm [shape: bf16[256,128], index: 1, kind: input, shape index: {}]
  %s2 = inlined_call_operand.hbm [shape: f32[128,128], index: 2, kind: output, shape index: {}]
  %s3 = sld [smem:[#allocation0]]
  $region30: #{tpu_custom_call.1} parent=0
    _
  %s5 = ssub.s32 1, %s3
  %s6 = scalar_select 0, %s5, %s3
  $region1: #{tpu_custom_call.1} parent=0
    #allocation2 [shape = 'u8[65536]{0}', space=vmem, size = 0x10000, scoped, tag = 'input window, operand 0, single buffered']
    #allocation3 [shape = 's32[1]{0}', space=sflag, size = 0x4, scoped, tag = 'scoped memory for tpu_custom_call.1']
    #allocation4 [shape = 's32[1]{0}', space=sflag, size = 0x4, scoped, tag = 'scoped memory for tpu_custom_call.1']
    #allocation5 [shape = 'u8[65536]{0}', space=vmem, size = 0x10000, scoped, tag = 'input window, operand 1, single buffered']
    #allocation6 [shape = 's32[1]{0}', space=sflag, size = 0x4, scoped, tag = 'scoped memory for tpu_custom_call.1']
    #allocation7 [shape = 'u8[65536]{0}', space=vmem, size = 0x10000, scoped, tag = 'output window, operand 0, single buffered']
    %7 = vsyncpa [#allocation3], 0
    %8 = vsyncpa [#allocation6], 0
    %9 = vsyncpa [#allocation4], 0
    // Predicated region
    $region2: #{tpu_custom_call.1} parent=1 // pred_check
      _
    $region3: #{tpu_custom_call.1} parent=1 // pred_check_branch
      %11 = sbr.rel (0) target = $region5
    $region4: #{tpu_custom_call.1} parent=1 // pred_region
      %13 = vsyncadd [#allocation3], 0
      %s14 = sshll.u32 %s0, 4
      %s15 = int_to_ptr.hbm [resolvable:$true] %s14
      %s16 = sshll.u32 [#allocation2], 4
      %s17 = int_to_ptr.vmem [resolvable:$true] %s16
      %22 = dma.hbm_to_vmem [thread:$0]  %s15, 2048, %s17, [#allocation3], 128, 128, 8
    $region5: #{tpu_custom_call.1} parent=1 // pred_fallthru
      _
    // Predicated region
    $region6: #{tpu_custom_call.1} parent=1 // pred_check
      _
    $region7: #{tpu_custom_call.1} parent=1 // pred_check_branch
      %24 = sbr.rel (0) target = $region9
    $region8: #{tpu_custom_call.1} parent=1 // pred_region
      %26 = vsyncadd [#allocation6], 0
      %s27 = sshll.u32 %s1, 4
      %s28 = int_to_ptr.hbm [resolvable:$true] %s27
      %s29 = sshll.u32 [#allocation5], 4
      %s30 = int_to_ptr.vmem [resolvable:$true] %s29
      %35 = dma.hbm_to_vmem [thread:$0]  %s28, 2048, %s30, [#allocation6], 64, 64, 4
    $region9: #{tpu_custom_call.1} parent=1 // pred_fallthru
      _
    // Predicated region
    $region10: #{tpu_custom_call.1} parent=1 // pred_check
      _
    $region11: #{tpu_custom_call.1} parent=1 // pred_check_branch
      %37 = sbr.rel (0) target = $region13
    $region12: #{tpu_custom_call.1} parent=1 // pred_region
      %39 = dma.done [#allocation3], 2048
    $region13: #{tpu_custom_call.1} parent=1 // pred_fallthru
      _
    // Predicated region
    $region14: #{tpu_custom_call.1} parent=1 // pred_check
      _
    $region15: #{tpu_custom_call.1} parent=1 // pred_check_branch
      %41 = sbr.rel (0) target = $region17
    $region16: #{tpu_custom_call.1} parent=1 // pred_region
      %43 = dma.done [#allocation6], 2048
    $region17: #{tpu_custom_call.1} parent=1 // pred_fallthru
      _
    %p44 = scmp.eq.s32.totalorder 0, 0
    // Predicated region
    $region18: #{tpu_custom_call.1} parent=1 // pred_check
      %p45 = pneg %p44
    $region19: #{tpu_custom_call.1} parent=1 // pred_check_branch
      %47 = sbr.rel (%p45) target = $region21
    $region20: #{tpu_custom_call.1} parent=1 // pred_region
      %48 = vst [vmem:[#allocation7] sm:$0xff] 0.0
      %49 = vst [vmem:[#allocation7 + $0x8] sm:$0xff] 0.0
      %50 = vst [vmem:[#allocation7 + $0x10] sm:$0xff] 0.0
      %51 = vst [vmem:[#allocation7 + $0x18] sm:$0xff] 0.0
      %52 = vst [vmem:[#allocation7 + $0x20] sm:$0xff] 0.0
      %53 = vst [vmem:[#allocation7 + $0x28] sm:$0xff] 0.0
      %54 = vst [vmem:[#allocation7 + $0x30] sm:$0xff] 0.0
      %55 = vst [vmem:[#allocation7 + $0x38] sm:$0xff] 0.0
      %56 = vst [vmem:[#allocation7 + $0x40] sm:$0xff] 0.0
      %57 = vst [vmem:[#allocation7 + $0x48] sm:$0xff] 0.0
      %58 = vst [vmem:[#allocation7 + $0x50] sm:$0xff] 0.0
      %59 = vst [vmem:[#allocation7 + $0x58] sm:$0xff] 0.0
      %60 = vst [vmem:[#allocation7 + $0x60] sm:$0xff] 0.0
      %61 = vst [vmem:[#allocation7 + $0x68] sm:$0xff] 0.0
      %62 = vst [vmem:[#allocation7 + $0x70] sm:$0xff] 0.0
      %63 = vst [vmem:[#allocation7 + $0x78] sm:$0xff] 0.0
    $region21: #{tpu_custom_call.1} parent=1 // pred_fallthru
      _
    %v64 = vld [vmem:[#allocation7] sm:$0xff]
    %v65 = vld [vmem:[#allocation7 + $0x8] sm:$0xff]
    %v66 = vld [vmem:[#allocation7 + $0x10] sm:$0xff]
    %v67 = vld [vmem:[#allocation7 + $0x18] sm:$0xff]
    %v68 = vld [vmem:[#allocation7 + $0x20] sm:$0xff]
    %v69 = vld [vmem:[#allocation7 + $0x28] sm:$0xff]
    %v70 = vld [vmem:[#allocation7 + $0x30] sm:$0xff]
    %v71 = vld [vmem:[#allocation7 + $0x38] sm:$0xff]
    %v72 = vld [vmem:[#allocation7 + $0x40] sm:$0xff]
    %v73 = vld [vmem:[#allocation7 + $0x48] sm:$0xff]
    %v74 = vld [vmem:[#allocation7 + $0x50] sm:$0xff]
    %v75 = vld [vmem:[#allocation7 + $0x58] sm:$0xff]
    %v76 = vld [vmem:[#allocation7 + $0x60] sm:$0xff]
    %v77 = vld [vmem:[#allocation7 + $0x68] sm:$0xff]
    %v78 = vld [vmem:[#allocation7 + $0x70] sm:$0xff]
    %v79 = vld [vmem:[#allocation7 + $0x78] sm:$0xff]
    %v80 = vld [vmem:[#allocation2] sm:$0xff]
    %v81 = vld [vmem:[#allocation2 + $0x8] sm:$0xff]
    %v82 = vld [vmem:[#allocation2 + $0x10] sm:$0xff]
    %v83 = vld [vmem:[#allocation2 + $0x18] sm:$0xff]
    %v84 = vld [vmem:[#allocation2 + $0x20] sm:$0xff]
    %v85 = vld [vmem:[#allocation2 + $0x28] sm:$0xff]
    %v86 = vld [vmem:[#allocation2 + $0x30] sm:$0xff]
    %v87 = vld [vmem:[#allocation2 + $0x38] sm:$0xff]
    %v88 = vld [vmem:[#allocation2 + $0x40] sm:$0xff]
    %v89 = vld [vmem:[#allocation2 + $0x48] sm:$0xff]
    %v90 = vld [vmem:[#allocation2 + $0x50] sm:$0xff]
    %v91 = vld [vmem:[#allocation2 + $0x58] sm:$0xff]
    %v92 = vld [vmem:[#allocation2 + $0x60] sm:$0xff]
    %v93 = vld [vmem:[#allocation2 + $0x68] sm:$0xff]
    %v94 = vld [vmem:[#allocation2 + $0x70] sm:$0xff]
    %v95 = vld [vmem:[#allocation2 + $0x78] sm:$0xff]
    %v96 = vld [vmem:[#allocation5] sm:$0xf]
    %v97 = vld [vmem:[#allocation5 + $0x4] sm:$0xf]
    %v98 = vld [vmem:[#allocation5 + $0x8] sm:$0xf]
    %v99 = vld [vmem:[#allocation5 + $0xc] sm:$0xf]
    %v100 = vld [vmem:[#allocation5 + $0x10] sm:$0xf]
    %v101 = vld [vmem:[#allocation5 + $0x14] sm:$0xf]
    %v102 = vld [vmem:[#allocation5 + $0x18] sm:$0xf]
    %v103 = vld [vmem:[#allocation5 + $0x1c] sm:$0xf]
    %v104 = vld [vmem:[#allocation5 + $0x20] sm:$0xf]
    %v105 = vld [vmem:[#allocation5 + $0x24] sm:$0xf]
    %v106 = vld [vmem:[#allocation5 + $0x28] sm:$0xf]
    %v107 = vld [vmem:[#allocation5 + $0x2c] sm:$0xf]
    %v108 = vld [vmem:[#allocation5 + $0x30] sm:$0xf]
    %v109 = vld [vmem:[#allocation5 + $0x34] sm:$0xf]
    %v110 = vld [vmem:[#allocation5 + $0x38] sm:$0xf]
    %v111 = vld [vmem:[#allocation5 + $0x3c] sm:$0xf]
    %v112 = vld [vmem:[#allocation5 + $0x40] sm:$0xf]
    %v113 = vld [vmem:[#allocation5 + $0x44] sm:$0xf]
    %v114 = vld [vmem:[#allocation5 + $0x48] sm:$0xf]
    %v115 = vld [vmem:[#allocation5 + $0x4c] sm:$0xf]
    %v116 = vld [vmem:[#allocation5 + $0x50] sm:$0xf]
    %v117 = vld [vmem:[#allocation5 + $0x54] sm:$0xf]
    %v118 = vld [vmem:[#allocation5 + $0x58] sm:$0xf]
    %v119 = vld [vmem:[#allocation5 + $0x5c] sm:$0xf]
    %v120 = vld [vmem:[#allocation5 + $0x60] sm:$0xf]
    %v121 = vld [vmem:[#allocation5 + $0x64] sm:$0xf]
    %v122 = vld [vmem:[#allocation5 + $0x68] sm:$0xf]
    %v123 = vld [vmem:[#allocation5 + $0x6c] sm:$0xf]
    %v124 = vld [vmem:[#allocation5 + $0x70] sm:$0xf]
    %v125 = vld [vmem:[#allocation5 + $0x74] sm:$0xf]
    %v126 = vld [vmem:[#allocation5 + $0x78] sm:$0xf]
    %v127 = vld [vmem:[#allocation5 + $0x7c] sm:$0xf]
    %v144 = vunpack.c.l.b16 %v80
    %v145 = vunpack.c.h.b16 %v80
    %v146 = vunpack.c.l.b16 %v81
    %v147 = vunpack.c.h.b16 %v81
    %v148 = vunpack.c.l.b16 %v82
    %v149 = vunpack.c.h.b16 %v82
    %v150 = vunpack.c.l.b16 %v83
    %v151 = vunpack.c.h.b16 %v83
    %v152 = vunpack.c.l.b16 %v84
    %v153 = vunpack.c.h.b16 %v84
    %v154 = vunpack.c.l.b16 %v85
    %v155 = vunpack.c.h.b16 %v85
    %v156 = vunpack.c.l.b16 %v86
    %v157 = vunpack.c.h.b16 %v86
    %v158 = vunpack.c.l.b16 %v87
    %v159 = vunpack.c.h.b16 %v87
    %v160 = vunpack.c.l.b16 %v88
    %v161 = vunpack.c.h.b16 %v88
    %v162 = vunpack.c.l.b16 %v89
    %v163 = vunpack.c.h.b16 %v89
    %v164 = vunpack.c.l.b16 %v90
    %v165 = vunpack.c.h.b16 %v90
    %v166 = vunpack.c.l.b16 %v91
    %v167 = vunpack.c.h.b16 %v91
    %v168 = vunpack.c.l.b16 %v92
    %v169 = vunpack.c.h.b16 %v92
    %v170 = vunpack.c.l.b16 %v93
    %v171 = vunpack.c.h.b16 %v93
    %v172 = vunpack.c.l.b16 %v94
    %v173 = vunpack.c.h.b16 %v94
    %v174 = vunpack.c.l.b16 %v95
    %v175 = vunpack.c.h.b16 %v95
    %v176 = vpack.c.b16 %v146, %v144
    %v177 = vpack.c.b16 %v147, %v145
    %v178 = vpack.c.b16 %v150, %v148
    %v179 = vpack.c.b16 %v151, %v149
    %v180 = vpack.c.b16 %v154, %v152
    %v181 = vpack.c.b16 %v155, %v153
    %v182 = vpack.c.b16 %v158, %v156
    %v183 = vpack.c.b16 %v159, %v157
    %v184 = vpack.c.b16 %v162, %v160
    %v185 = vpack.c.b16 %v163, %v161
    %v186 = vpack.c.b16 %v166, %v164
    %v187 = vpack.c.b16 %v167, %v165
    %v188 = vpack.c.b16 %v170, %v168
    %v189 = vpack.c.b16 %v171, %v169
    %v190 = vpack.c.b16 %v174, %v172
    %v191 = vpack.c.b16 %v175, %v173
    %v240 = vunpack.c.l.b16 %v96
    %v241 = vunpack.c.l.b16 %v97
    %v242 = vunpack.c.l.b16 %v98
    %v243 = vunpack.c.l.b16 %v99
    %v244 = vunpack.c.l.b16 %v100
    %v245 = vunpack.c.l.b16 %v101
    %v246 = vunpack.c.l.b16 %v102
    %v247 = vunpack.c.l.b16 %v103
    %v248 = vunpack.c.l.b16 %v104
    %v249 = vunpack.c.l.b16 %v105
    %v250 = vunpack.c.l.b16 %v106
    %v251 = vunpack.c.l.b16 %v107
    %v252 = vunpack.c.l.b16 %v108
    %v253 = vunpack.c.l.b16 %v109
    %v254 = vunpack.c.l.b16 %v110
    %v255 = vunpack.c.l.b16 %v111
    %v256 = vunpack.c.l.b16 %v112
    %v257 = vunpack.c.l.b16 %v113
    %v258 = vunpack.c.l.b16 %v114
    %v259 = vunpack.c.l.b16 %v115
    %v260 = vunpack.c.l.b16 %v116
    %v261 = vunpack.c.l.b16 %v117
    %v262 = vunpack.c.l.b16 %v118
    %v263 = vunpack.c.l.b16 %v119
    %v264 = vunpack.c.l.b16 %v120
    %v265 = vunpack.c.l.b16 %v121
    %v266 = vunpack.c.l.b16 %v122
    %v267 = vunpack.c.l.b16 %v123
    %v268 = vunpack.c.l.b16 %v124
    %v269 = vunpack.c.l.b16 %v125
    %v270 = vunpack.c.l.b16 %v126
    %v271 = vunpack.c.l.b16 %v127
    %v272 = vpack.c.b16 %v241, %v240
    %v273 = vpack.c.b16 %v243, %v242
    %v274 = vpack.c.b16 %v245, %v244
    %v275 = vpack.c.b16 %v247, %v246
    %v276 = vpack.c.b16 %v249, %v248
    %v277 = vpack.c.b16 %v251, %v250
    %v278 = vpack.c.b16 %v253, %v252
    %v279 = vpack.c.b16 %v255, %v254
    %v280 = vpack.c.b16 %v257, %v256
    %v281 = vpack.c.b16 %v259, %v258
    %v282 = vpack.c.b16 %v261, %v260
    %v283 = vpack.c.b16 %v263, %v262
    %v284 = vpack.c.b16 %v265, %v264
    %v285 = vpack.c.b16 %v267, %v266
    %v286 = vpack.c.b16 %v269, %v268
    %v287 = vpack.c.b16 %v271, %v270
    %304 = vmatpush.bf16.msra.mxu0 %v279
    %305 = vmatpush.bf16.msra.mxu0 %v278
    %306 = vmatpush.bf16.msra.mxu0 %v277
    %307 = vmatpush.bf16.msra.mxu0 %v276
    %308 = vmatpush.bf16.msra.mxu0 %v275
    %309 = vmatpush.bf16.msra.mxu0 %v274
    %310 = vmatpush.bf16.msra.mxu0 %v273
    %311 = vmatpush.bf16.msra.mxu0 %v272
    %312 = vmatmul.bf16.gmra.mxu0 %v176
    %v313 = vpop.f32.mrf.mxu0
    %v314 = vadd.f32 0.0, %v313
    %v315 = vpop.f32.mrf.mxu0
    %v316 = vadd.f32 0.0, %v315
    %317 = vmatmul.bf16.gmra.mxu0 %v178
    %v318 = vpop.f32.mrf.mxu0
    %v319 = vadd.f32 0.0, %v318
    %v320 = vpop.f32.mrf.mxu0
    %v321 = vadd.f32 0.0, %v320
    %322 = vmatmul.bf16.gmra.mxu0 %v180
    %v323 = vpop.f32.mrf.mxu0
    %v324 = vadd.f32 0.0, %v323
    %v325 = vpop.f32.mrf.mxu0
    %v326 = vadd.f32 0.0, %v325
    %327 = vmatmul.bf16.gmra.mxu0 %v182
    %v328 = vpop.f32.mrf.mxu0
    %v329 = vadd.f32 0.0, %v328
    %v330 = vpop.f32.mrf.mxu0
    %v331 = vadd.f32 0.0, %v330
    %332 = vmatmul.bf16.gmra.mxu0 %v184
    %v333 = vpop.f32.mrf.mxu0
    %v334 = vadd.f32 0.0, %v333
    %v335 = vpop.f32.mrf.mxu0
    %v336 = vadd.f32 0.0, %v335
    %337 = vmatmul.bf16.gmra.mxu0 %v186
    %v338 = vpop.f32.mrf.mxu0
    %v339 = vadd.f32 0.0, %v338
    %v340 = vpop.f32.mrf.mxu0
    %v341 = vadd.f32 0.0, %v340
    %342 = vmatmul.bf16.gmra.mxu0 %v188
    %v343 = vpop.f32.mrf.mxu0
    %v344 = vadd.f32 0.0, %v343
    %v345 = vpop.f32.mrf.mxu0
    %v346 = vadd.f32 0.0, %v345
    %347 = vmatmul.bf16.gmra.mxu0 %v190
    %v348 = vpop.f32.mrf.mxu0
    %v349 = vadd.f32 0.0, %v348
    %v350 = vpop.f32.mrf.mxu0
    %v351 = vadd.f32 0.0, %v350
    %352 = vdwg.mxu0
    %353 = vmatpush.bf16.msra.mxu0 %v287
    %354 = vmatpush.bf16.msra.mxu0 %v286
    %355 = vmatpush.bf16.msra.mxu0 %v285
    %356 = vmatpush.bf16.msra.mxu0 %v284
    %357 = vmatpush.bf16.msra.mxu0 %v283
    %358 = vmatpush.bf16.msra.mxu0 %v282
    %359 = vmatpush.bf16.msra.mxu0 %v281
    %360 = vmatpush.bf16.msra.mxu0 %v280
    %361 = vmatmul.bf16.gmra.mxu0 %v177
    %v362 = vpop.f32.mrf.mxu0
    %v363 = vadd.f32 %v314, %v362
    %v364 = vpop.f32.mrf.mxu0
    %v365 = vadd.f32 %v316, %v364
    %366 = vmatmul.bf16.gmra.mxu0 %v179
    %v367 = vpop.f32.mrf.mxu0
    %v368 = vadd.f32 %v319, %v367
    %v369 = vpop.f32.mrf.mxu0
    %v370 = vadd.f32 %v321, %v369
    %371 = vmatmul.bf16.gmra.mxu0 %v181
    %v372 = vpop.f32.mrf.mxu0
    %v373 = vadd.f32 %v324, %v372
    %v374 = vpop.f32.mrf.mxu0
    %v375 = vadd.f32 %v326, %v374
    %376 = vmatmul.bf16.gmra.mxu0 %v183
    %v377 = vpop.f32.mrf.mxu0
    %v378 = vadd.f32 %v329, %v377
    %v379 = vpop.f32.mrf.mxu0
    %v380 = vadd.f32 %v331, %v379
    %381 = vmatmul.bf16.gmra.mxu0 %v185
    %v382 = vpop.f32.mrf.mxu0
    %v383 = vadd.f32 %v334, %v382
    %v384 = vpop.f32.mrf.mxu0
    %v385 = vadd.f32 %v336, %v384
    %386 = vmatmul.bf16.gmra.mxu0 %v187
    %v387 = vpop.f32.mrf.mxu0
    %v388 = vadd.f32 %v339, %v387
    %v389 = vpop.f32.mrf.mxu0
    %v390 = vadd.f32 %v341, %v389
    %391 = vmatmul.bf16.gmra.mxu0 %v189
    %v392 = vpop.f32.mrf.mxu0
    %v393 = vadd.f32 %v344, %v392
    %v394 = vpop.f32.mrf.mxu0
    %v395 = vadd.f32 %v346, %v394
    %396 = vmatmul.bf16.gmra.mxu0 %v191
    %v397 = vpop.f32.mrf.mxu0
    %v398 = vadd.f32 %v349, %v397
    %v399 = vpop.f32.mrf.mxu0
    %v400 = vadd.f32 %v351, %v399
    %401 = vdwg.mxu0
    %v402 = vadd.f32 %v64, %v363
    %v403 = vadd.f32 %v65, %v365
    %v404 = vadd.f32 %v66, %v368
    %v405 = vadd.f32 %v67, %v370
    %v406 = vadd.f32 %v68, %v373
    %v407 = vadd.f32 %v69, %v375
    %v408 = vadd.f32 %v70, %v378
    %v409 = vadd.f32 %v71, %v380
    %v410 = vadd.f32 %v72, %v383
    %v411 = vadd.f32 %v73, %v385
    %v412 = vadd.f32 %v74, %v388
    %v413 = vadd.f32 %v75, %v390
    %v414 = vadd.f32 %v76, %v393
    %v415 = vadd.f32 %v77, %v395
    %v416 = vadd.f32 %v78, %v398
    %v417 = vadd.f32 %v79, %v400
    %418 = vst [vmem:[#allocation7] sm:$0xff] %v402
    %419 = vst [vmem:[#allocation7 + $0x8] sm:$0xff] %v403
    %420 = vst [vmem:[#allocation7 + $0x10] sm:$0xff] %v404
    %421 = vst [vmem:[#allocation7 + $0x18] sm:$0xff] %v405
    %422 = vst [vmem:[#allocation7 + $0x20] sm:$0xff] %v406
    %423 = vst [vmem:[#allocation7 + $0x28] sm:$0xff] %v407
    %424 = vst [vmem:[#allocation7 + $0x30] sm:$0xff] %v408
    %425 = vst [vmem:[#allocation7 + $0x38] sm:$0xff] %v409
    %426 = vst [vmem:[#allocation7 + $0x40] sm:$0xff] %v410
    %427 = vst [vmem:[#allocation7 + $0x48] sm:$0xff] %v411
    %428 = vst [vmem:[#allocation7 + $0x50] sm:$0xff] %v412
    %429 = vst [vmem:[#allocation7 + $0x58] sm:$0xff] %v413
    %430 = vst [vmem:[#allocation7 + $0x60] sm:$0xff] %v414
    %431 = vst [vmem:[#allocation7 + $0x68] sm:$0xff] %v415
    %432 = vst [vmem:[#allocation7 + $0x70] sm:$0xff] %v416
    %433 = vst [vmem:[#allocation7 + $0x78] sm:$0xff] %v417
    // Predicated region
    $region22: #{tpu_custom_call.1} parent=1 // pred_check
      _
    $region23: #{tpu_custom_call.1} parent=1 // pred_check_branch
      %435 = sbr.rel (0) target = $region25
    $region24: #{tpu_custom_call.1} parent=1 // pred_region
      %437 = vsyncadd [#allocation4], 0
      %s438 = sshll.u32 [#allocation7], 4
      %s439 = int_to_ptr.vmem [resolvable:$true] %s438
      %s440 = sshll.u32 %s2, 4
      %s441 = int_to_ptr.hbm [resolvable:$true] %s440
      %446 = dma.vmem_to_hbm [thread:$0]  %s439, 2048, %s441, [#allocation4], 128, 128, 8
    $region25: #{tpu_custom_call.1} parent=1 // pred_fallthru
      _
    // Predicated region
    $region26: #{tpu_custom_call.1} parent=1 // pred_check
      _
    $region27: #{tpu_custom_call.1} parent=1 // pred_check_branch
      %448 = sbr.rel (0) target = $region29
    $region28: #{tpu_custom_call.1} parent=1 // pred_region
      %450 = dma.done [#allocation4], 2048
    $region29: #{tpu_custom_call.1} parent=1 // pred_fallthru
      _
    %451 = vsyncpa [#allocation3], 1
    %452 = vsyncpa [#allocation6], 1
    %453 = vsyncpa [#allocation4], 1

</llo_original>
